<compile_context>
chip_gen: v5e
topology: v5e:2x2
jax: 0.10.0
libtpu: 0.0.40
codegen_flags: <defaults>
</compile_context>

<pallas_src>
import jax
import jax.numpy as jnp
from jax.experimental import pallas as pl
from jax.experimental.pallas import tpu as pltpu

GAMMA = 2.0          # hard-coded: modulating factor computed as d*d
ALPHA = 0.25

_LANES = 128
_MAX_BLOCK_ROWS = 1024          # (1024, 128) f32 block = 512 KiB
_NEUTRAL_LOGIT = -1e9           # exp(-|x|)=0, sigmoid=0, BCE(x, 0)=0 exactly


def _build_kernel(block_rows, grid_blocks, ncores, steps_per_core, partial_rows):
    """Specialize the kernel on the (static) tiling configuration."""
    has_partial = partial_rows != block_rows              # last block has OOB rows
    has_empty = ncores * steps_per_core > grid_blocks     # core 1 has a no-op step

    def kernel(pred_ref, true_ref, bce_out_ref, afm_out_ref, bce_acc, afm_acc):
        c = pl.program_id(0)          # core / outer split
        i = pl.program_id(1)          # per-core reduction step

        @pl.when(i == 0)
        def _init():
            bce_acc[...] = jnp.zeros_like(bce_acc)
            afm_acc[...] = jnp.zeros_like(afm_acc)

        x = pred_ref[...].astype(jnp.float32)
        y = true_ref[...].astype(jnp.float32)

        def accumulate(xv, yv):
            # one shared exp: e = exp(-|x|) feeds both BCE and sigmoid
            e = jnp.exp(-jnp.abs(xv))
            # numerically-stable BCE-with-logits: max(x,0) - x*y + log1p(exp(-|x|))
            bce = jnp.maximum(xv, 0.0) - xv * yv + jnp.log1p(e)
            inv = 1.0 / (1.0 + e)
            p = jnp.where(xv >= 0.0, inv, e * inv)            # sigmoid(x)
            d = yv - p
            # alpha_factor = y*ALPHA + (1-y)*(1-ALPHA)
            af = (1.0 - ALPHA) + (2.0 * ALPHA - 1.0) * yv
            bce_acc[...] = bce_acc[...] + bce
            afm_acc[...] = afm_acc[...] + af * (d * d)        # gamma == 2 -> square

        gb = c * steps_per_core + i                           # global block index

        if has_partial:
            @pl.when(gb < grid_blocks - 1)
            def _full():
                accumulate(x, y)

            @pl.when(gb == grid_blocks - 1)
            def _tail():
                # Only the final block pays for the mask; invalid rows are
                # replaced by neutral values so they contribute exactly zero.
                rowi = jax.lax.broadcasted_iota(jnp.int32, x.shape, 0)
                valid = rowi < partial_rows
                accumulate(jnp.where(valid, x, _NEUTRAL_LOGIT),
                           jnp.where(valid, y, 0.0))
        elif has_empty:
            @pl.when(gb < grid_blocks)
            def _full():
                accumulate(x, y)
        else:
            accumulate(x, y)

        @pl.when(i == steps_per_core - 1)
        def _finalize():
            # Single cross-sublane reduce per core; lane-dense (1,1,128) output.
            bce_out_ref[...] = jnp.sum(bce_acc[...], axis=0,
                                       keepdims=True).reshape(1, 1, _LANES)
            afm_out_ref[...] = jnp.sum(afm_acc[...], axis=0,
                                       keepdims=True).reshape(1, 1, _LANES)

    return kernel, has_empty


def focal_loss(pred, true):
    """Pallas TPU implementation of FocalLoss.forward (reduction='mean')."""
    assert pred.shape == true.shape
    n = pred.size
    assert n > 0

    pf = pred.reshape(-1)
    tf = true.reshape(-1)

    # Pad only when numel is not a lane multiple (<=127 neutral elements).
    rem = n % _LANES
    if rem:
        pad = _LANES - rem
        pf = jnp.pad(pf, (0, pad), constant_values=_NEUTRAL_LOGIT)
        tf = jnp.pad(tf, (0, pad), constant_values=0)

    rows = pf.size // _LANES
    pf = pf.reshape(rows, _LANES)          # copy-free reshape
    tf = tf.reshape(rows, _LANES)

    # Static tiling configuration.
    block_rows = rows if rows <= _MAX_BLOCK_ROWS else _MAX_BLOCK_ROWS
    grid_blocks = -(-rows // block_rows)
    partial_rows = rows - (grid_blocks - 1) * block_rows
    ncores = 2 if grid_blocks >= 2 else 1          # v7x: use both TensorCores
    steps_per_core = -(-grid_blocks // ncores)

    kernel, has_empty = _build_kernel(block_rows, grid_blocks, ncores,
                                      steps_per_core, partial_rows)

    def in_index(c, i):
        gb = c * steps_per_core + i
        if has_empty:
            # keep the (skipped) trailing step of the second core in-bounds
            gb = jnp.minimum(gb, grid_blocks - 1)
        return (gb, 0)

    in_spec = pl.BlockSpec((block_rows, _LANES), in_index)
    out_spec = pl.BlockSpec((1, 1, _LANES), lambda c, i: (c, 0, 0))

    bce_part, afm_part = pl.pallas_call(
        kernel,
        out_shape=(jax.ShapeDtypeStruct((ncores, 1, _LANES), jnp.float32),
                   jax.ShapeDtypeStruct((ncores, 1, _LANES), jnp.float32)),
        grid_spec=pltpu.PrefetchScalarGridSpec(
            num_scalar_prefetch=0,
            grid=(ncores, steps_per_core),
            in_specs=[in_spec, in_spec],
            out_specs=(out_spec, out_spec),
            scratch_shapes=[pltpu.VMEM((block_rows, _LANES), jnp.float32),
                            pltpu.VMEM((block_rows, _LANES), jnp.float32)]),
        compiler_params=pltpu.CompilerParams(
            dimension_semantics=("parallel", "arbitrary")),
    )(pf, tf)

    nf = jnp.float32(n)
    # mean(alpha_factor * mod_factor * bce_scalar) = (sum_afm/N) * (sum_bce/N)
    return (jnp.sum(bce_part) / nf) * (jnp.sum(afm_part) / nf)


def _focal_loss_ref(pred, true):
    """Pure-JAX reference with identical semantics (for verification)."""
    x = pred.astype(jnp.float32)
    y = true.astype(jnp.float32)
    bce_elem = jnp.maximum(x, 0.0) - x * y + jnp.log1p(jnp.exp(-jnp.abs(x)))
    bce_scalar = jnp.mean(bce_elem)
    p = jax.nn.sigmoid(x)
    alpha_factor = y * ALPHA + (1.0 - y) * (1.0 - ALPHA)
    mod_factor = jnp.abs(y - p) ** GAMMA
    return jnp.mean(alpha_factor * mod_factor * bce_scalar)


if __name__ == "__main__":
    key = jax.random.PRNGKey(0)
    shapes = [
        (2, 4, 16, 16),    # small NCHW: single block, single core
        (4, 18, 64, 64),   # multi-block: 2-core split + partial last block
        (3, 5, 7, 11),     # numel % 128 != 0: lane-tail (neutral pad) path
    ]
    for idx, shape in enumerate(shapes):
        k1, k2 = jax.random.split(jax.random.fold_in(key, idx))
        pred = jax.random.normal(k1, shape, dtype=jnp.float32)
        true = (jax.random.uniform(k2, shape) > 0.5).astype(jnp.float32)

        out = jax.block_until_ready(focal_loss(pred, true))
        ref = jax.block_until_ready(_focal_loss_ref(pred, true))
        assert jnp.allclose(out, ref, rtol=1e-4, atol=1e-7), (shape, out, ref)

    print("KERNEL_OK")
</pallas_src>

<mosaic_0001>
module attributes {stable_mosaic.version = 11 : i64} {
  func.func @kernel(%arg0: i32, %arg1: i32, %arg2: memref<16x128xf32, #tpu.memory_space<vmem>>, %arg3: memref<16x128xf32, #tpu.memory_space<vmem>>, %arg4: memref<1x1x128xf32, #tpu.memory_space<vmem>>, %arg5: memref<1x1x128xf32, #tpu.memory_space<vmem>>, %arg6: memref<16x128xf32, #tpu.memory_space<vmem>>, %arg7: memref<16x128xf32, #tpu.memory_space<vmem>>) attributes {dimension_semantics = [#tpu.dimension_semantics<parallel>, #tpu.dimension_semantics<arbitrary>], iteration_bounds = array<i64: 1, 1>, scalar_prefetch = 0 : i64, scratch_operands = 2 : i64, tpu.core_type = #tpu.core_type<tc>, window_params = [{transform_indices = @transform_0, window_bounds = array<i64: 16, 128>}, {transform_indices = @transform_1, window_bounds = array<i64: 16, 128>}, {transform_indices = @transform_2, window_bounds = array<i64: 1, 1, 128>}, {transform_indices = @transform_3, window_bounds = array<i64: 1, 1, 128>}]} {
    %c0_i32 = arith.constant 0 : i32
    %0 = arith.cmpi eq, %arg1, %c0_i32 : i32
    %1 = arith.extui %0 : i1 to i32
    %c0_i32_0 = arith.constant 0 : i32
    %2 = arith.cmpi ne, %1, %c0_i32_0 : i32
    scf.if %2 {
      %cst_20 = arith.constant 0.000000e+00 : f32
      %39 = vector.broadcast %cst_20 : f32 to vector<16x128xf32>
      %c0_21 = arith.constant 0 : index
      %c0_22 = arith.constant 0 : index
      %40 = vector.load %arg6[%c0_21, %c0_22] : memref<16x128xf32, #tpu.memory_space<vmem>>, vector<16x128xf32>
      tpu.vector_store %arg6[%c0_21, %c0_22], %39 {strides = array<i32>} : memref<16x128xf32, #tpu.memory_space<vmem>>, vector<16x128xf32>,
      %cst_23 = arith.constant 0.000000e+00 : f32
      %41 = vector.broadcast %cst_23 : f32 to vector<16x128xf32>
      %c0_24 = arith.constant 0 : index
      %c0_25 = arith.constant 0 : index
      %42 = vector.load %arg7[%c0_24, %c0_25] : memref<16x128xf32, #tpu.memory_space<vmem>>, vector<16x128xf32>
      tpu.vector_store %arg7[%c0_24, %c0_25], %41 {strides = array<i32>} : memref<16x128xf32, #tpu.memory_space<vmem>>, vector<16x128xf32>,
    } else {
    }
    %c0 = arith.constant 0 : index
    %c0_1 = arith.constant 0 : index
    %3 = vector.load %arg2[%c0, %c0_1] : memref<16x128xf32, #tpu.memory_space<vmem>>, vector<16x128xf32>
    %c0_2 = arith.constant 0 : index
    %c0_3 = arith.constant 0 : index
    %4 = vector.load %arg3[%c0_2, %c0_3] : memref<16x128xf32, #tpu.memory_space<vmem>>, vector<16x128xf32>
    %5 = math.absf %3 : vector<16x128xf32>
    %cst = arith.constant 0.000000e+00 : f32
    %6 = vector.broadcast %cst : f32 to vector<16x128xf32>
    %7 = arith.subf %6, %5 : vector<16x128xf32>
    %8 = math.exp %7 : vector<16x128xf32>
    %cst_4 = arith.constant 0.000000e+00 : f32
    %9 = vector.broadcast %cst_4 : f32 to vector<16x128xf32>
    %10 = arith.maximumf %3, %9 : vector<16x128xf32>
    %11 = arith.mulf %3, %4 : vector<16x128xf32>
    %12 = arith.subf %10, %11 : vector<16x128xf32>
    %13 = math.log1p %8 : vector<16x128xf32>
    %14 = arith.addf %12, %13 : vector<16x128xf32>
    %cst_5 = arith.constant 1.000000e+00 : f32
    %15 = vector.broadcast %cst_5 : f32 to vector<16x128xf32>
    %16 = arith.addf %15, %8 : vector<16x128xf32>
    %cst_6 = arith.constant 1.000000e+00 : f32
    %17 = vector.broadcast %cst_6 : f32 to vector<16x128xf32>
    %18 = arith.divf %17, %16 : vector<16x128xf32>
    %cst_7 = arith.constant 0.000000e+00 : f32
    %19 = vector.broadcast %cst_7 : f32 to vector<16x128xf32>
    %20 = arith.cmpf oge, %3, %19 : vector<16x128xf32>
    %21 = arith.mulf %8, %18 : vector<16x128xf32>
    %22 = arith.select %20, %18, %21 : vector<16x128xi1>, vector<16x128xf32>
    %23 = arith.subf %4, %22 : vector<16x128xf32>
    %cst_8 = arith.constant -5.000000e-01 : f32
    %24 = vector.broadcast %cst_8 : f32 to vector<16x128xf32>
    %25 = arith.mulf %24, %4 : vector<16x128xf32>
    %cst_9 = arith.constant 7.500000e-01 : f32
    %26 = vector.broadcast %cst_9 : f32 to vector<16x128xf32>
    %27 = arith.addf %26, %25 : vector<16x128xf32>
    %c0_10 = arith.constant 0 : index
    %c0_11 = arith.constant 0 : index
    %28 = vector.load %arg6[%c0_10, %c0_11] : memref<16x128xf32, #tpu.memory_space<vmem>>, vector<16x128xf32>
    %29 = arith.addf %28, %14 : vector<16x128xf32>
    %c0_12 = arith.constant 0 : index
    %c0_13 = arith.constant 0 : index
    %30 = vector.load %arg6[%c0_12, %c0_13] : memref<16x128xf32, #tpu.memory_space<vmem>>, vector<16x128xf32>
    tpu.vector_store %arg6[%c0_12, %c0_13], %29 {strides = array<i32>} : memref<16x128xf32, #tpu.memory_space<vmem>>, vector<16x128xf32>,
    %c0_14 = arith.constant 0 : index
    %c0_15 = arith.constant 0 : index
    %31 = vector.load %arg7[%c0_14, %c0_15] : memref<16x128xf32, #tpu.memory_space<vmem>>, vector<16x128xf32>
    %32 = arith.mulf %23, %23 : vector<16x128xf32>
    %33 = arith.mulf %27, %32 : vector<16x128xf32>
    %34 = arith.addf %31, %33 : vector<16x128xf32>
    %c0_16 = arith.constant 0 : index
    %c0_17 = arith.constant 0 : index
    %35 = vector.load %arg7[%c0_16, %c0_17] : memref<16x128xf32, #tpu.memory_space<vmem>>, vector<16x128xf32>
    tpu.vector_store %arg7[%c0_16, %c0_17], %34 {strides = array<i32>} : memref<16x128xf32, #tpu.memory_space<vmem>>, vector<16x128xf32>,
    %c0_i32_18 = arith.constant 0 : i32
    %36 = arith.cmpi eq, %arg1, %c0_i32_18 : i32
    %37 = arith.extui %36 : i1 to i32
    %c0_i32_19 = arith.constant 0 : i32
    %38 = arith.cmpi ne, %37, %c0_i32_19 : i32
    scf.if %38 {
      %c0_20 = arith.constant 0 : index
      %c0_21 = arith.constant 0 : index
      %39 = vector.load %arg6[%c0_20, %c0_21] : memref<16x128xf32, #tpu.memory_space<vmem>>, vector<16x128xf32>
      %cst_22 = arith.constant dense<0.000000e+00> : vector<128xf32>
      %40 = vector.multi_reduction <add>, %39, %cst_22 [0] : vector<16x128xf32> to vector<128xf32>
      %41 = vector.shape_cast %40 : vector<128xf32> to vector<1x128xf32>
      %42 = vector.shape_cast %41 : vector<1x128xf32> to vector<1x1x128xf32>
      %c0_23 = arith.constant 0 : index
      %c0_24 = arith.constant 0 : index
      %c0_25 = arith.constant 0 : index
      %43 = vector.load %arg4[%c0_23, %c0_24, %c0_25] : memref<1x1x128xf32, #tpu.memory_space<vmem>>, vector<1x1x128xf32>
      tpu.vector_store %arg4[%c0_23, %c0_24, %c0_25], %42 {strides = array<i32>} : memref<1x1x128xf32, #tpu.memory_space<vmem>>, vector<1x1x128xf32>,
      %c0_26 = arith.constant 0 : index
      %c0_27 = arith.constant 0 : index
      %44 = vector.load %arg7[%c0_26, %c0_27] : memref<16x128xf32, #tpu.memory_space<vmem>>, vector<16x128xf32>
      %cst_28 = arith.constant dense<0.000000e+00> : vector<128xf32>
      %45 = vector.multi_reduction <add>, %44, %cst_28 [0] : vector<16x128xf32> to vector<128xf32>
      %46 = vector.shape_cast %45 : vector<128xf32> to vector<1x128xf32>
      %47 = vector.shape_cast %46 : vector<1x128xf32> to vector<1x1x128xf32>
      %c0_29 = arith.constant 0 : index
      %c0_30 = arith.constant 0 : index
      %c0_31 = arith.constant 0 : index
      %48 = vector.load %arg5[%c0_29, %c0_30, %c0_31] : memref<1x1x128xf32, #tpu.memory_space<vmem>>, vector<1x1x128xf32>
      tpu.vector_store %arg5[%c0_29, %c0_30, %c0_31], %47 {strides = array<i32>} : memref<1x1x128xf32, #tpu.memory_space<vmem>>, vector<1x1x128xf32>,
    } else {
    }
    return
  }
  func.func @transform_0(%arg0: i32, %arg1: i32) -> (i32, i32) {
    %c1_i32 = arith.constant 1 : i32
    %0 = arith.muli %arg0, %c1_i32 : i32
    %1 = arith.addi %0, %arg1 : i32
    %c0_i32 = arith.constant 0 : i32
    %c0_i32_0 = arith.constant 0 : i32
    return %1, %c0_i32 : i32, i32
  }
  func.func @transform_1(%arg0: i32, %arg1: i32) -> (i32, i32) {
    %c1_i32 = arith.constant 1 : i32
    %0 = arith.muli %arg0, %c1_i32 : i32
    %1 = arith.addi %0, %arg1 : i32
    %c0_i32 = arith.constant 0 : i32
    %c0_i32_0 = arith.constant 0 : i32
    return %1, %c0_i32 : i32, i32
  }
  func.func @transform_2(%arg0: i32, %arg1: i32) -> (i32, i32, i32) {
    %c0_i32 = arith.constant 0 : i32
    %c0_i32_0 = arith.constant 0 : i32
    %c0_i32_1 = arith.constant 0 : i32
    return %arg0, %c0_i32, %c0_i32_0 : i32, i32, i32
  }
  func.func @transform_3(%arg0: i32, %arg1: i32) -> (i32, i32, i32) {
    %c0_i32 = arith.constant 0 : i32
    %c0_i32_0 = arith.constant 0 : i32
    %c0_i32_1 = arith.constant 0 : i32
    return %arg0, %c0_i32, %c0_i32_0 : i32, i32, i32
  }
}

</mosaic_0001>

<llo_original>
// kernel: tpu_custom_call.1
$region0: #{tpu_custom_call.1}
  #allocation0 [shape = 'u32[]', space=smem, size = 0x4, offset = 0x4, fixed_abs, tag = 'smem constant byte address 0x4 - core index']
  #allocation1 [shape = 'u32[72,128]{1,0:T(1,128)}', space=vmem, size = 0x9000, scoped, tag = 'internal scratch']
  #allocation2 [shape = 'f32[16,128]{1,0:T(8,128)}', space=vmem, size = 0x2000, scoped, tag = 'scratch operand']
  #allocation3 [shape = 'f32[16,128]{1,0:T(8,128)}', space=vmem, size = 0x2000, scoped, tag = 'scratch operand']
  %s0 = inlined_call_operand.hbm [shape: f32[16,128], index: 0, kind: input, shape index: {}]
  %s1 = inlined_call_operand.hbm [shape: f32[16,128], index: 1, kind: input, shape index: {}]
  %s2 = inlined_call_operand.hbm [shape: f32[1,1,128], index: 2, kind: output, shape index: {0}]
  %s3 = inlined_call_operand.hbm [shape: f32[1,1,128], index: 3, kind: output, shape index: {1}]
  %4 = xla_tuple %s2, %s3
  %s5 = sld [smem:[#allocation0]]
  $region42: #{tpu_custom_call.1} parent=0
    _
  %s7 = ssub.s32 1, %s5
  %s8 = scalar_select 0, %s7, %s5
  $region1: #{tpu_custom_call.1} parent=0
    #allocation4 [shape = 'u8[8192]{0}', space=vmem, size = 0x2000, scoped, tag = 'input window, operand 0, single buffered']
    #allocation5 [shape = 's32[1]{0}', space=sflag, size = 0x4, scoped, tag = 'scoped memory for tpu_custom_call.1']
    #allocation6 [shape = 's32[1]{0}', space=sflag, size = 0x4, scoped, tag = 'scoped memory for tpu_custom_call.1']
    #allocation7 [shape = 'u8[8192]{0}', space=vmem, size = 0x2000, scoped, tag = 'input window, operand 1, single buffered']
    #allocation8 [shape = 's32[1]{0}', space=sflag, size = 0x4, scoped, tag = 'scoped memory for tpu_custom_call.1']
    #allocation9 [shape = 'u8[512]{0}', space=vmem, size = 0x400, scoped, tag = 'output window, operand 0, single buffered']
    #allocation10 [shape = 'u8[512]{0}', space=vmem, size = 0x400, scoped, tag = 'output window, operand 1, single buffered']
    #allocation11 [shape = 's32[1]{0}', space=sflag, size = 0x4, scoped, tag = 'scoped memory for tpu_custom_call.1']
    %9 = vsyncpa [#allocation5], 0
    %10 = vsyncpa [#allocation8], 0
    %11 = vsyncpa [#allocation6], 0
    %12 = vsyncpa [#allocation11], 0
    // Predicated region
    $region2: #{tpu_custom_call.1} parent=1 // pred_check
      _
    $region3: #{tpu_custom_call.1} parent=1 // pred_check_branch
      %14 = sbr.rel (0) target = $region5
    $region4: #{tpu_custom_call.1} parent=1 // pred_region
      %s15 = sadd.s32 0, 0
      %s16 = smul.u32 2, %s15
      %18 = vsyncadd [#allocation5], 0
      %s19 = smul.addr %s16, 8
      %s20 = scalar_lea.hbm %s0, %s19
      %s21 = sshll.u32 %s20, 4
      %s22 = int_to_ptr.hbm [resolvable:$true] %s21
      %s23 = sshll.u32 [#allocation4], 4
      %s24 = int_to_ptr.vmem [resolvable:$true] %s23
      %29 = dma.hbm_to_vmem [thread:$0]  %s22, 256, %s24, [#allocation5], 128, 128, 8
    $region5: #{tpu_custom_call.1} parent=1 // pred_fallthru
      _
    // Predicated region
    $region6: #{tpu_custom_call.1} parent=1 // pred_check
      _
    $region7: #{tpu_custom_call.1} parent=1 // pred_check_branch
      %31 = sbr.rel (0) target = $region9
    $region8: #{tpu_custom_call.1} parent=1 // pred_region
      %s32 = sadd.s32 0, 0
      %s33 = smul.u32 2, %s32
      %35 = vsyncadd [#allocation8], 0
      %s36 = smul.addr %s33, 8
      %s37 = scalar_lea.hbm %s1, %s36
      %s38 = sshll.u32 %s37, 4
      %s39 = int_to_ptr.hbm [resolvable:$true] %s38
      %s40 = sshll.u32 [#allocation7], 4
      %s41 = int_to_ptr.vmem [resolvable:$true] %s40
      %46 = dma.hbm_to_vmem [thread:$0]  %s39, 256, %s41, [#allocation8], 128, 128, 8
    $region9: #{tpu_custom_call.1} parent=1 // pred_fallthru
      _
    // Predicated region
    $region10: #{tpu_custom_call.1} parent=1 // pred_check
      _
    $region11: #{tpu_custom_call.1} parent=1 // pred_check_branch
      %48 = sbr.rel (0) target = $region13
    $region12: #{tpu_custom_call.1} parent=1 // pred_region
      %50 = dma.done [#allocation5], 256
    $region13: #{tpu_custom_call.1} parent=1 // pred_fallthru
      _
    // Predicated region
    $region14: #{tpu_custom_call.1} parent=1 // pred_check
      _
    $region15: #{tpu_custom_call.1} parent=1 // pred_check_branch
      %52 = sbr.rel (0) target = $region17
    $region16: #{tpu_custom_call.1} parent=1 // pred_region
      %54 = dma.done [#allocation8], 256
    $region17: #{tpu_custom_call.1} parent=1 // pred_fallthru
      _
    %s55 = sadd.s32 0, 0
    %s56 = smul.u32 2, %s55
    %s57 = sadd.s32 0, 0
    %s58 = smul.u32 2, %s57
    %p59 = scmp.eq.s32.totalorder 0, 0
    // Predicated region
    $region18: #{tpu_custom_call.1} parent=1 // pred_check
      %p60 = pneg %p59
    $region19: #{tpu_custom_call.1} parent=1 // pred_check_branch
      %62 = sbr.rel (%p60) target = $region21
    $region20: #{tpu_custom_call.1} parent=1 // pred_region
      %63 = vst [vmem:[#allocation2] sm:$0xff] 0.0
      %64 = vst [vmem:[#allocation2 + $0x8] sm:$0xff] 0.0
      %65 = vst [vmem:[#allocation3] sm:$0xff] 0.0
      %66 = vst [vmem:[#allocation3 + $0x8] sm:$0xff] 0.0
    $region21: #{tpu_custom_call.1} parent=1 // pred_fallthru
      _
    %v67 = vld [vmem:[#allocation4] sm:$0xff]
    %v68 = vld [vmem:[#allocation4 + $0x8] sm:$0xff]
    %v69 = vld [vmem:[#allocation7] sm:$0xff]
    %v70 = vld [vmem:[#allocation7 + $0x8] sm:$0xff]
    %v71 = vand.u32 2147483647, %v67
    %v72 = vand.u32 2147483647, %v68
    %v73 = vsub.f32 0.0, %v71
    %v74 = vsub.f32 0.0, %v72
    %v75 = vmul.f32 %v73, 1.442695
    %v76 = vpow.pop %v75
    %v77 = vmul.f32 %v74, 1.442695
    %v78 = vpow.pop %v77
    %v79 = vmax.f32 %v67, 0.0
    %v80 = vmax.f32 %v68, 0.0
    %v81 = vmul.f32 %v67, %v69
    %v82 = vmul.f32 %v68, %v70
    %v83 = vsub.f32 %v79, %v81
    %v84 = vsub.f32 %v80, %v82
    %v85 = vadd.f32 %v76, 1.0
    %v86 = vlog2.pop %v85
    %v87 = vmul.f32 %v86, 0.6931472
    %v88 = vmul.f32 -0.5, %v76
    %v89 = vadd.f32 %v88, 1.0
    %v90 = vmul.f32 %v89, %v76
    %v91 = vand.u32 2147483647, %v76
    %vm92 = vcmp.lt.f32.partialorder %v91, 0.0004427343
    %v93 = vsel %vm92, %v90, %v87
    %v94 = vadd.f32 %v78, 1.0
    %v95 = vlog2.pop %v94
    %v96 = vmul.f32 %v95, 0.6931472
    %v97 = vmul.f32 -0.5, %v78
    %v98 = vadd.f32 %v97, 1.0
    %v99 = vmul.f32 %v98, %v78
    %v100 = vand.u32 2147483647, %v78
    %vm101 = vcmp.lt.f32.partialorder %v100, 0.0004427343
    %v102 = vsel %vm101, %v99, %v96
    %v103 = vadd.f32 %v83, %v93
    %v104 = vadd.f32 %v84, %v102
    %v105 = vadd.f32 %v76, 1.0
    %v106 = vadd.f32 %v78, 1.0
    %v107 = vrcp.pop %v105
    %v108 = vmul.f32 %v105, %v107
    %v109 = vsub.f32 1.0, %v108
    %v110 = vmul.f32 %v107, %v109
    %v111 = vadd.f32 %v107, %v110
    %vm112 = vweird.f32 %v105
    %vm113 = vweird.f32 %v107
    %vm114 = vmor %vm112, %vm113
    %v115 = vsel %vm114, %v107, %v111
    %v116 = vand.u32 2147483647, %v105
    %vm117 = vcmp.eq.f32.partialorder %v116, 8.507059e+37
    %v118 = vand.u32 %v105, 2147483648
    %v119 = vor.u32 1.1754944e-38, %v118
    %v120 = vsel %vm117, %v119, %v115
    %v121 = vmul.f32 1.0, %v120
    %v122 = vrcp.pop %v106
    %v123 = vmul.f32 %v106, %v122
    %v124 = vsub.f32 1.0, %v123
    %v125 = vmul.f32 %v122, %v124
    %v126 = vadd.f32 %v122, %v125
    %vm127 = vweird.f32 %v106
    %vm128 = vweird.f32 %v122
    %vm129 = vmor %vm127, %vm128
    %v130 = vsel %vm129, %v122, %v126
    %v131 = vand.u32 2147483647, %v106
    %vm132 = vcmp.eq.f32.partialorder %v131, 8.507059e+37
    %v133 = vand.u32 %v106, 2147483648
    %v134 = vor.u32 1.1754944e-38, %v133
    %v135 = vsel %vm132, %v134, %v130
    %v136 = vmul.f32 1.0, %v135
    %vm137 = vcmp.ge.f32.partialorder %v67, 0.0
    %vm138 = vcmp.ge.f32.partialorder %v68, 0.0
    %v139 = vmul.f32 %v76, %v121
    %v140 = vmul.f32 %v78, %v136
    %v141 = vsel %vm137, %v121, %v139
    %v142 = vsel %vm138, %v136, %v140
    %v143 = vsub.f32 %v69, %v141
    %v144 = vsub.f32 %v70, %v142
    %v145 = vmul.f32 %v69, -0.5
    %v146 = vmul.f32 %v70, -0.5
    %v147 = vadd.f32 %v145, 0.75
    %v148 = vadd.f32 %v146, 0.75
    %v149 = vld [vmem:[#allocation2] sm:$0xff]
    %v150 = vld [vmem:[#allocation2 + $0x8] sm:$0xff]
    %v151 = vadd.f32 %v149, %v103
    %v152 = vadd.f32 %v150, %v104
    %153 = vst [vmem:[#allocation2] sm:$0xff] %v151
    %154 = vst [vmem:[#allocation2 + $0x8] sm:$0xff] %v152
    %v155 = vld [vmem:[#allocation3] sm:$0xff]
    %v156 = vld [vmem:[#allocation3 + $0x8] sm:$0xff]
    %v157 = vmul.f32 %v143, %v143
    %v158 = vmul.f32 %v144, %v144
    %v159 = vmul.f32 %v147, %v157
    %v160 = vmul.f32 %v148, %v158
    %v161 = vadd.f32 %v155, %v159
    %v162 = vadd.f32 %v156, %v160
    %163 = vst [vmem:[#allocation3] sm:$0xff] %v161
    %164 = vst [vmem:[#allocation3 + $0x8] sm:$0xff] %v162
    // Predicated region
    $region22: #{tpu_custom_call.1} parent=1 // pred_check
      %p165 = pneg %p59
    $region23: #{tpu_custom_call.1} parent=1 // pred_check_branch
      %167 = sbr.rel (%p165) target = $region25
    $region24: #{tpu_custom_call.1} parent=1 // pred_region
      %v168 = vld [vmem:[#allocation2] sm:$0xff]
      %v169 = vld [vmem:[#allocation2 + $0x8] sm:$0xff]
      %v170 = vadd.f32 %v168, %v169
      %v171 = vrot.slane %v170, 4
      %v172 = vadd.f32 %v170, %v171
      %v173 = vrot.slane %v172, 2
      %v174 = vadd.f32 %v172, %v173
      %v175 = vrot.slane %v174, 1
      %v176 = vadd.f32 %v174, %v175
      %177 = vst [vmem:[#allocation9] sm:$0x1] %v176
      %v178 = vld [vmem:[#allocation3] sm:$0xff]
      %v179 = vld [vmem:[#allocation3 + $0x8] sm:$0xff]
      %v180 = vadd.f32 %v178, %v179
      %v181 = vrot.slane %v180, 4
      %v182 = vadd.f32 %v180, %v181
      %v183 = vrot.slane %v182, 2
      %v184 = vadd.f32 %v182, %v183
      %v185 = vrot.slane %v184, 1
      %v186 = vadd.f32 %v184, %v185
      %187 = vst [vmem:[#allocation10] sm:$0x1] %v186
    $region25: #{tpu_custom_call.1} parent=1 // pred_fallthru
      _
    // Predicated region
    $region26: #{tpu_custom_call.1} parent=1 // pred_check
      _
    $region27: #{tpu_custom_call.1} parent=1 // pred_check_branch
      %189 = sbr.rel (0) target = $region29
    $region28: #{tpu_custom_call.1} parent=1 // pred_region
      %191 = vsyncadd [#allocation6], 0
      %s193 = sshll.u32 [#allocation9], 4
      %s194 = int_to_ptr.vmem [resolvable:$true] %s193
      %s195 = sshll.u32 %s2, 4
      %s196 = int_to_ptr.hbm [resolvable:$true] %s195
      %198 = dma.vmem_to_hbm [thread:$0]  %s194, 16, %s196, [#allocation6]
    $region29: #{tpu_custom_call.1} parent=1 // pred_fallthru
      _
    // Predicated region
    $region30: #{tpu_custom_call.1} parent=1 // pred_check
      _
    $region31: #{tpu_custom_call.1} parent=1 // pred_check_branch
      %200 = sbr.rel (0) target = $region33
    $region32: #{tpu_custom_call.1} parent=1 // pred_region
      %202 = vsyncadd [#allocation11], 0
      %s204 = sshll.u32 [#allocation10], 4
      %s205 = int_to_ptr.vmem [resolvable:$true] %s204
      %s206 = sshll.u32 %s3, 4
      %s207 = int_to_ptr.hbm [resolvable:$true] %s206
      %209 = dma.vmem_to_hbm [thread:$0]  %s205, 16, %s207, [#allocation11]
    $region33: #{tpu_custom_call.1} parent=1 // pred_fallthru
      _
    // Predicated region
    $region34: #{tpu_custom_call.1} parent=1 // pred_check
      _
    $region35: #{tpu_custom_call.1} parent=1 // pred_check_branch
      %211 = sbr.rel (0) target = $region37
    $region36: #{tpu_custom_call.1} parent=1 // pred_region
      %213 = dma.done [#allocation6], 16
    $region37: #{tpu_custom_call.1} parent=1 // pred_fallthru
      _
    // Predicated region
    $region38: #{tpu_custom_call.1} parent=1 // pred_check
      _
    $region39: #{tpu_custom_call.1} parent=1 // pred_check_branch
      %215 = sbr.rel (0) target = $region41
    $region40: #{tpu_custom_call.1} parent=1 // pred_region
      %217 = dma.done [#allocation11], 16
    $region41: #{tpu_custom_call.1} parent=1 // pred_fallthru
      _
    %218 = vsyncpa [#allocation5], 1
    %219 = vsyncpa [#allocation8], 1
    %220 = vsyncpa [#allocation6], 1
    %221 = vsyncpa [#allocation11], 1

</llo_original>
